<compile_context>
chip_gen: v7x
topology: tpu7x:2x2x1
jax: 0.10.0
libtpu: 0.0.40
codegen_flags: <defaults>
</compile_context>

<pallas_src>
import jax
import jax.numpy as jnp
from jax.experimental import pallas as pl
from jax.experimental.pallas import tpu as pltpu


def _round_up(n: int, m: int) -> int:
    return ((n + m - 1) // m) * m


def _fused_linear_relu_kernel(x_ref, y_ref, wx_ref, wy_ref, b_ref, o_ref):
    """Two accumulating MXU dots + bias + ReLU, one lane-dense store."""
    cdt = wx_ref.dtype  # bf16 compute path (weights packed in bf16)
    acc = jnp.dot(x_ref[...].astype(cdt), wx_ref[...],
                  preferred_element_type=jnp.float32)
    acc = acc + jnp.dot(y_ref[...].astype(cdt), wy_ref[...],
                        preferred_element_type=jnp.float32)
    acc = acc + b_ref[...]                      # f32 bias, broadcast over rows
    o_ref[...] = jnp.maximum(acc, 0.0).astype(o_ref.dtype)


def prepare_params(wx, bx, wy, by, *, param_dtype=jnp.bfloat16):
    """One-time parameter packing (do this OUTSIDE the per-step hot path).

    wx: (out, x_in), wy: (out, y_in), bx/by: (out,)  [PyTorch nn.Linear layout]

    Returns (wxt, wyt, b_packed, out_dim):
      wxt: (x_in, out_pad)  transposed, lane-padded, cast to param_dtype
      wyt: (y_in, out_pad)  transposed, lane-padded, cast to param_dtype
      b_packed: (1, out_pad) f32, summed biases (bx + by), lane-padded
    """
    out_dim = wx.shape[0]
    out_pad = _round_up(out_dim, 128)           # lane-dense output stores
    pad = out_pad - out_dim
    wxt = jnp.pad(wx.T, ((0, 0), (0, pad))).astype(param_dtype)
    wyt = jnp.pad(wy.T, ((0, 0), (0, pad))).astype(param_dtype)
    b = (bx + by).astype(jnp.float32).reshape(1, out_dim)
    b_packed = jnp.pad(b, ((0, 0), (0, pad)))
    return wxt, wyt, b_packed, out_dim


def linear_with_concat_and_activation(x, y, wxt, wyt, b_packed, out_dim,
                                      *, tile_m=512):
    """ReLU(x @ Wx^T + bx + y @ Wy^T + by) as a single Pallas kernel.

    x: (B, x_in), y: (B, y_in); wxt/wyt/b_packed from prepare_params().
    Returns (B, out_dim) in x.dtype.
    """
    B, x_in = x.shape
    By, y_in = y.shape
    assert B == By, "x and y must share the batch dimension"
    out_pad = wxt.shape[1]
    assert wxt.shape[0] == x_in and wyt.shape[0] == y_in
    assert wyt.shape[1] == out_pad and b_packed.shape == (1, out_pad)

    # Batch tile: (8, ...)-aligned, clamped for small problems.
    tm = min(tile_m, _round_up(B, 8))
    # v7x has 2 TensorCores: make sure the parallel grid axis has >= 2 blocks
    # whenever there is enough batch to split.
    if B > 8 and pl.cdiv(B, tm) < 2:
        tm = _round_up(pl.cdiv(B, 2), 8)
    grid_m = pl.cdiv(B, tm)   # ragged last tile handled by Pallas (masked)

    # VMEM budget: resident weights/bias + double-buffered activation/output
    # tiles.  Only raise the scoped-VMEM limit when we would exceed the
    # smallest default (v5e 16 MiB / v6e,v7x 32 MiB).
    w_bytes = (wxt.size * wxt.dtype.itemsize
               + wyt.size * wyt.dtype.itemsize
               + b_packed.size * b_packed.dtype.itemsize)
    tile_bytes = 2 * tm * ((x_in + y_in) * x.dtype.itemsize
                           + out_pad * x.dtype.itemsize)
    est_vmem = w_bytes + tile_bytes
    cp_kwargs = dict(dimension_semantics=("parallel",))
    if est_vmem > 14 * 1024 * 1024:
        cp_kwargs["vmem_limit_bytes"] = int(est_vmem * 3 // 2)

    out = pl.pallas_call(
        _fused_linear_relu_kernel,
        out_shape=jax.ShapeDtypeStruct((B, out_pad), x.dtype),
        grid_spec=pltpu.PrefetchScalarGridSpec(
            num_scalar_prefetch=0,
            grid=(grid_m,),
            in_specs=[
                # Activations: streamed per batch tile (last dim = full K half,
                # so no lane-alignment constraint applies).
                pl.BlockSpec((tm, x_in), lambda i: (i, 0)),
                pl.BlockSpec((tm, y_in), lambda i: (i, 0)),
                # Weights + bias: constant index map -> VMEM-resident, DMA'd
                # once instead of once per batch tile.
                pl.BlockSpec((x_in, out_pad), lambda i: (0, 0)),
                pl.BlockSpec((y_in, out_pad), lambda i: (0, 0)),
                pl.BlockSpec((1, out_pad), lambda i: (0, 0)),
            ],
            out_specs=pl.BlockSpec((tm, out_pad), lambda i: (i, 0)),
        ),
        compiler_params=pltpu.CompilerParams(**cp_kwargs),
    )(x, y, wxt, wyt, b_packed)

    return out[:, :out_dim] if out_pad != out_dim else out


def _init_linear_params(key, in_dim, out_dim):
    # Deterministic init mimicking PyTorch nn.Linear default:
    # U(-1/sqrt(in_dim), 1/sqrt(in_dim)) for both weight and bias.
    kw, kb = jax.random.split(key)
    bound = 1.0 / jnp.sqrt(jnp.float32(in_dim))
    w = jax.random.uniform(kw, (out_dim, in_dim), jnp.float32, -bound, bound)
    b = jax.random.uniform(kb, (out_dim,), jnp.float32, -bound, bound)
    return w, b


if __name__ == "__main__":
    key = jax.random.PRNGKey(0)
    k_x, k_y, k_lx, k_ly = jax.random.split(key, 4)

    B, X_IN, Y_IN, OUT = 8, 32, 16, 64

    x = jax.random.normal(k_x, (B, X_IN), jnp.float32)
    y = jax.random.normal(k_y, (B, Y_IN), jnp.float32)

    wx, bx = _init_linear_params(k_lx, X_IN, OUT)
    wy, by = _init_linear_params(k_ly, Y_IN, OUT)

    # Pack parameters once (outside the hot path), then run the fused kernel.
    wxt, wyt, b_packed, out_dim = prepare_params(wx, bx, wy, by)
    out = linear_with_concat_and_activation(x, y, wxt, wyt, b_packed, out_dim)
    out = jax.block_until_ready(out)

    # Pure-JAX f32 reference (same math as the PyTorch forward).  The kernel
    # uses bf16 weights/activations with f32 accumulation, so use a bf16-level
    # tolerance.
    ref = jnp.maximum(x @ wx.T + bx + y @ wy.T + by, 0.0)
    assert out.shape == (B, OUT)
    max_err = float(jnp.max(jnp.abs(out.astype(jnp.float32) - ref)))
    assert jnp.allclose(out.astype(jnp.float32), ref, atol=5e-2, rtol=5e-2), max_err

    print("KERNEL_OK")
</pallas_src>

<mosaic_0001>
module attributes {stable_mosaic.version = 11 : i64} {
  func.func @_fused_linear_relu_kernel(%arg0: i32, %arg1: memref<8x32xf32, #tpu.memory_space<vmem>>, %arg2: memref<8x16xf32, #tpu.memory_space<vmem>>, %arg3: memref<32x128xbf16, #tpu.memory_space<vmem>>, %arg4: memref<16x128xbf16, #tpu.memory_space<vmem>>, %arg5: memref<1x128xf32, #tpu.memory_space<vmem>>, %arg6: memref<8x128xf32, #tpu.memory_space<vmem>>) attributes {dimension_semantics = [#tpu.dimension_semantics<parallel>], iteration_bounds = array<i64: 1>, scalar_prefetch = 0 : i64, scratch_operands = 0 : i64, tpu.core_type = #tpu.core_type<tc>, window_params = [{transform_indices = @transform_0, window_bounds = array<i64: 8, 32>}, {transform_indices = @transform_1, window_bounds = array<i64: 8, 16>}, {pipeline_mode = #tpu.pipeline_mode<synchronous>, transform_indices = @transform_2, window_bounds = array<i64: 32, 128>}, {pipeline_mode = #tpu.pipeline_mode<synchronous>, transform_indices = @transform_3, window_bounds = array<i64: 16, 128>}, {pipeline_mode = #tpu.pipeline_mode<synchronous>, transform_indices = @transform_4, window_bounds = array<i64: 1, 128>}, {transform_indices = @transform_5, window_bounds = array<i64: 8, 128>}]} {
    %c0 = arith.constant 0 : index
    %c0_0 = arith.constant 0 : index
    %0 = vector.load %arg1[%c0, %c0_0] : memref<8x32xf32, #tpu.memory_space<vmem>>, vector<8x32xf32>
    %1 = arith.truncf %0 : vector<8x32xf32> to vector<8x32xbf16>
    %c0_1 = arith.constant 0 : index
    %c0_2 = arith.constant 0 : index
    %2 = vector.load %arg3[%c0_1, %c0_2] : memref<32x128xbf16, #tpu.memory_space<vmem>>, vector<32x128xbf16>
    %cst = arith.constant dense<0.000000e+00> : vector<8x128xf32>
    %3 = tpu.matmul %1, %2, %cst {dimension_numbers = #tpu.dot_dimension_numbers<[1], [0], [0], [1], [0, 0, 1, 1], [], []>} : vector<8x32xbf16>, vector<32x128xbf16>, vector<8x128xf32> -> vector<8x128xf32>
    %c0_3 = arith.constant 0 : index
    %c0_4 = arith.constant 0 : index
    %4 = vector.load %arg2[%c0_3, %c0_4] : memref<8x16xf32, #tpu.memory_space<vmem>>, vector<8x16xf32>
    %5 = arith.truncf %4 : vector<8x16xf32> to vector<8x16xbf16>
    %c0_5 = arith.constant 0 : index
    %c0_6 = arith.constant 0 : index
    %6 = vector.load %arg4[%c0_5, %c0_6] : memref<16x128xbf16, #tpu.memory_space<vmem>>, vector<16x128xbf16>
    %cst_7 = arith.constant dense<0.000000e+00> : vector<8x128xf32>
    %7 = tpu.matmul %5, %6, %cst_7 {dimension_numbers = #tpu.dot_dimension_numbers<[1], [0], [0], [1], [0, 0, 1, 1], [], []>} : vector<8x16xbf16>, vector<16x128xbf16>, vector<8x128xf32> -> vector<8x128xf32>
    %8 = arith.addf %3, %7 : vector<8x128xf32>
    %c0_8 = arith.constant 0 : index
    %c0_9 = arith.constant 0 : index
    %9 = vector.load %arg5[%c0_8, %c0_9] : memref<1x128xf32, #tpu.memory_space<vmem>>, vector<1x128xf32>
    %10 = vector.broadcast %9 : vector<1x128xf32> to vector<8x128xf32>
    %11 = arith.addf %8, %10 : vector<8x128xf32>
    %cst_10 = arith.constant 0.000000e+00 : f32
    %12 = vector.broadcast %cst_10 : f32 to vector<8x128xf32>
    %13 = arith.maximumf %11, %12 : vector<8x128xf32>
    %c0_11 = arith.constant 0 : index
    %c0_12 = arith.constant 0 : index
    %14 = vector.load %arg6[%c0_11, %c0_12] : memref<8x128xf32, #tpu.memory_space<vmem>>, vector<8x128xf32>
    tpu.vector_store %arg6[%c0_11, %c0_12], %13 {strides = array<i32>} : memref<8x128xf32, #tpu.memory_space<vmem>>, vector<8x128xf32>,
    return
  }
  func.func @transform_0(%arg0: i32) -> (i32, i32) {
    %c0_i32 = arith.constant 0 : i32
    %c0_i32_0 = arith.constant 0 : i32
    return %arg0, %c0_i32 : i32, i32
  }
  func.func @transform_1(%arg0: i32) -> (i32, i32) {
    %c0_i32 = arith.constant 0 : i32
    %c0_i32_0 = arith.constant 0 : i32
    return %arg0, %c0_i32 : i32, i32
  }
  func.func @transform_2(%arg0: i32) -> (i32, i32) {
    %c0_i32 = arith.constant 0 : i32
    %c0_i32_0 = arith.constant 0 : i32
    %c0_i32_1 = arith.constant 0 : i32
    return %c0_i32, %c0_i32_0 : i32, i32
  }
  func.func @transform_3(%arg0: i32) -> (i32, i32) {
    %c0_i32 = arith.constant 0 : i32
    %c0_i32_0 = arith.constant 0 : i32
    %c0_i32_1 = arith.constant 0 : i32
    return %c0_i32, %c0_i32_0 : i32, i32
  }
  func.func @transform_4(%arg0: i32) -> (i32, i32) {
    %c0_i32 = arith.constant 0 : i32
    %c0_i32_0 = arith.constant 0 : i32
    %c0_i32_1 = arith.constant 0 : i32
    return %c0_i32, %c0_i32_0 : i32, i32
  }
  func.func @transform_5(%arg0: i32) -> (i32, i32) {
    %c0_i32 = arith.constant 0 : i32
    %c0_i32_0 = arith.constant 0 : i32
    return %arg0, %c0_i32 : i32, i32
  }
}

</mosaic_0001>

<llo_original>
// kernel: tpu_custom_call.1
$region0: #{tpu_custom_call.1}
  #allocation0 [shape = 'u32[]', space=smem, size = 0x4, offset = 0x4, fixed_abs, tag = 'smem constant byte address 0x4 - core index']
  #allocation1 [shape = 'u32[144,128]{1,0:T(1,128)}', space=vmem, size = 0x12000, scoped, tag = 'internal scratch']
  %s0 = inlined_call_operand.hbm [shape: f32[8,32], index: 0, kind: input, shape index: {}]
  %s1 = inlined_call_operand.hbm [shape: f32[8,16], index: 1, kind: input, shape index: {}]
  %s2 = inlined_call_operand.hbm [shape: bf16[32,128], index: 2, kind: input, shape index: {}]
  %s3 = inlined_call_operand.vmem [shape: bf16[16,128], index: 3, kind: input, shape index: {}]
  %s4 = inlined_call_operand.vmem [shape: f32[1,128], index: 4, kind: input, shape index: {}]
  %s5 = inlined_call_operand.hbm [shape: f32[8,128], index: 5, kind: output, shape index: {}]
  %s6 = sld [smem:[#allocation0]]
  $region42: #{tpu_custom_call.1} parent=0
    _
  %s8 = ssub.s32 1, %s6
  %s9 = scalar_select 0, %s8, %s6
  $region1: #{tpu_custom_call.1} parent=0
    #allocation2 [shape = 'u8[4096]{0}', space=vmem, size = 0x1000, scoped, tag = 'input window, operand 0, single buffered']
    #allocation3 [shape = 's32[1]{0}', space=sflag, size = 0x4, scoped, tag = 'scoped memory for tpu_custom_call.1']
    #allocation4 [shape = 's32[1]{0}', space=sflag, size = 0x4, scoped, tag = 'scoped memory for tpu_custom_call.1']
    #allocation5 [shape = 'u8[4096]{0}', space=vmem, size = 0x1000, scoped, tag = 'input window, operand 1, single buffered']
    #allocation6 [shape = 's32[1]{0}', space=sflag, size = 0x4, scoped, tag = 'scoped memory for tpu_custom_call.1']
    #allocation7 [shape = 'u8[8192]{0}', space=vmem, size = 0x2000, scoped, tag = 'input window, operand 2, single buffered']
    #allocation8 [shape = 'u8[4096]{0}', space=vmem, size = 0x1000, scoped, tag = 'output window, operand 0, single buffered']
    %10 = vsyncpa [#allocation3], 0
    %11 = vsyncpa [#allocation6], 0
    %12 = vsyncpa [#allocation4], 0
    // Predicated region
    $region2: #{tpu_custom_call.1} parent=1 // pred_check
      _
    $region3: #{tpu_custom_call.1} parent=1 // pred_check_branch
      %14 = sbr.rel (0) target = $region5
    $region4: #{tpu_custom_call.1} parent=1 // pred_region
      %s16 = ssub.s32 128, 128
      %17 = vsyncadd [#allocation3], %s16
      %s19 = sshll.u32 [#allocation2], 4
      %s20 = int_to_ptr.vmem [resolvable:$true] %s19
      %22 = dma.hbm_to_vmem [thread:$0]  %s0, 128, %s20, [#allocation3]
    $region5: #{tpu_custom_call.1} parent=1 // pred_fallthru
      _
    // Predicated region
    $region6: #{tpu_custom_call.1} parent=1 // pred_check
      _
    $region7: #{tpu_custom_call.1} parent=1 // pred_check_branch
      %24 = sbr.rel (0) target = $region9
    $region8: #{tpu_custom_call.1} parent=1 // pred_region
      %s26 = ssub.s32 128, 128
      %27 = vsyncadd [#allocation6], %s26
      %s29 = sshll.u32 [#allocation5], 4
      %s30 = int_to_ptr.vmem [resolvable:$true] %s29
      %32 = dma.hbm_to_vmem [thread:$0]  %s1, 128, %s30, [#allocation6]
    $region9: #{tpu_custom_call.1} parent=1 // pred_fallthru
      _
    // Predicated region
    $region10: #{tpu_custom_call.1} parent=1 // pred_check
      _
    $region11: #{tpu_custom_call.1} parent=1 // pred_check_branch
      %34 = sbr.rel (0) target = $region13
    $region12: #{tpu_custom_call.1} parent=1 // pred_region
      %s36 = ssub.s32 256, 256
      %37 = vsyncadd [#allocation6], %s36
      %s38 = sshll.u32 [#allocation7], 4
      %s39 = int_to_ptr.vmem [resolvable:$true] %s38
      %44 = dma.hbm_to_vmem [thread:$0]  %s2, 256, %s39, [#allocation6], 64, 64, 4
    $region13: #{tpu_custom_call.1} parent=1 // pred_fallthru
      _
    // Predicated region
    $region14: #{tpu_custom_call.1} parent=1 // pred_check
      _
    $region15: #{tpu_custom_call.1} parent=1 // pred_check_branch
      %46 = sbr.rel (0) target = $region17
    $region16: #{tpu_custom_call.1} parent=1 // pred_region
      _
    $region17: #{tpu_custom_call.1} parent=1 // pred_fallthru
      _
    // Predicated region
    $region18: #{tpu_custom_call.1} parent=1 // pred_check
      _
    $region19: #{tpu_custom_call.1} parent=1 // pred_check_branch
      %48 = sbr.rel (0) target = $region21
    $region20: #{tpu_custom_call.1} parent=1 // pred_region
      _
    $region21: #{tpu_custom_call.1} parent=1 // pred_fallthru
      _
    // Predicated region
    $region22: #{tpu_custom_call.1} parent=1 // pred_check
      _
    $region23: #{tpu_custom_call.1} parent=1 // pred_check_branch
      %50 = sbr.rel (0) target = $region25
    $region24: #{tpu_custom_call.1} parent=1 // pred_region
      %51 = dma.done [#allocation3], 128
    $region25: #{tpu_custom_call.1} parent=1 // pred_fallthru
      _
    // Predicated region
    $region26: #{tpu_custom_call.1} parent=1 // pred_check
      _
    $region27: #{tpu_custom_call.1} parent=1 // pred_check_branch
      %53 = sbr.rel (0) target = $region29
    $region28: #{tpu_custom_call.1} parent=1 // pred_region
      %54 = dma.done [#allocation6], 128
    $region29: #{tpu_custom_call.1} parent=1 // pred_fallthru
      _
    // Predicated region
    $region30: #{tpu_custom_call.1} parent=1 // pred_check
      _
    $region31: #{tpu_custom_call.1} parent=1 // pred_check_branch
      %56 = sbr.rel (0) target = $region33
    $region32: #{tpu_custom_call.1} parent=1 // pred_region
      %57 = dma.done [#allocation6], 256
    $region33: #{tpu_custom_call.1} parent=1 // pred_fallthru
      _
    %v59 = vld [vmem:[#allocation2] sm:$0xff]
    %v60 = vpack.c.bf16 %v59, %v59
    %v61 = vld [vmem:[#allocation7] sm:$0xf]
    %v62 = vld [vmem:[#allocation7 + $0x4] sm:$0xf]
    %v63 = vld [vmem:[#allocation7 + $0x8] sm:$0xf]
    %v64 = vld [vmem:[#allocation7 + $0xc] sm:$0xf]
    %v65 = vld [vmem:[#allocation5] sm:$0xff]
    %v66 = vpack.c.bf16 %v65, %v65
    %v67 = vld [vmem:[%s3] sm:$0xf]
    %v68 = vld [vmem:[%s3 + $0x4] sm:$0xf]
    %v71 = vunpack.c.l.b16 %v67
    %v72 = vunpack.c.l.b16 %v68
    %v73 = vpack.c.b16 %v72, %v71
    %vm75 = vcmask 130048
    %v77 = vsel %vm75, %v66, 0
    %79 = vmatprep.subr.bf16.mxu0 0
    %80 = vmatpush1.bf16.msra.mxu0 %v73
    %81 = vmatprep.subr.bf16.mxu0 0
    %82 = vmatpush1.bf16.msra.mxu0 0
    %83 = vmatprep.subr.bf16.mxu0 0
    %84 = vmatpush1.bf16.msra.mxu0 0
    %85 = vmatprep.subr.bf16.mxu0 0
    %86 = vmatpush1.bf16.msra.mxu0 0
    %87 = vmatprep.subr.bf16.mxu0 0
    %88 = vmatpush1.bf16.msra.mxu0 0
    %89 = vmatprep.subr.bf16.mxu0 0
    %90 = vmatpush1.bf16.msra.mxu0 0
    %91 = vmatprep.subr.bf16.mxu0 0
    %92 = vmatpush1.bf16.msra.mxu0 0
    %93 = vmatprep.subr.bf16.mxu0 0
    %94 = vmatpush1.bf16.msra.mxu0 0
    %95 = vmatprep.subr.bf16.mxu0 0
    %96 = vmatpush1.bf16.msra.mxu0 0
    %97 = vmatprep.subr.bf16.mxu0 0
    %98 = vmatpush1.bf16.msra.mxu0 0
    %99 = vmatprep.subr.bf16.mxu0 0
    %100 = vmatpush1.bf16.msra.mxu0 0
    %101 = vmatprep.subr.bf16.mxu0 0
    %102 = vmatpush1.bf16.msra.mxu0 0
    %103 = vmatprep.subr.bf16.mxu0 0
    %104 = vmatpush1.bf16.msra.mxu0 0
    %105 = vmatprep.subr.bf16.mxu0 0
    %106 = vmatpush1.bf16.msra.mxu0 0
    %107 = vmatprep.subr.bf16.mxu0 0
    %108 = vmatpush1.bf16.msra.mxu0 0
    %109 = vmatprep.subr.bf16.mxu0 0
    %110 = vmatpush1.bf16.msra.mxu0 0
    %111 = vmatprep.mubr.bf16.mxu0 0
    %112 = vmatmul.mubr.bf16.gmra.mrb[0].mxu0 %v77
    %v113 = vpop.f32.mrb[0].mxu0
    %v114 = vadd.f32 0.0, %v113
    %v115 = vpop.f32.mrb[0].mxu0
    %v116 = vpop.f32.mrb[0].mxu0
    %v117 = vpop.f32.mrb[0].mxu0
    %118 = vdwg.mxu0
    %v123 = vunpack.c.l.b16 %v61
    %v124 = vunpack.c.l.b16 %v62
    %v125 = vunpack.c.l.b16 %v63
    %v126 = vunpack.c.l.b16 %v64
    %v127 = vpack.c.b16 %v124, %v123
    %v128 = vpack.c.b16 %v126, %v125
    %vm131 = vcmask 261120
    %v133 = vsel %vm131, %v60, 0
    %135 = vmatprep.subr.bf16.mxu0 0
    %136 = vmatpush1.bf16.msra.mxu0 %v127
    %137 = vmatprep.subr.bf16.mxu0 0
    %138 = vmatpush1.bf16.msra.mxu0 %v128
    %139 = vmatprep.subr.bf16.mxu0 0
    %140 = vmatpush1.bf16.msra.mxu0 0
    %141 = vmatprep.subr.bf16.mxu0 0
    %142 = vmatpush1.bf16.msra.mxu0 0
    %143 = vmatprep.subr.bf16.mxu0 0
    %144 = vmatpush1.bf16.msra.mxu0 0
    %145 = vmatprep.subr.bf16.mxu0 0
    %146 = vmatpush1.bf16.msra.mxu0 0
    %147 = vmatprep.subr.bf16.mxu0 0
    %148 = vmatpush1.bf16.msra.mxu0 0
    %149 = vmatprep.subr.bf16.mxu0 0
    %150 = vmatpush1.bf16.msra.mxu0 0
    %151 = vmatprep.subr.bf16.mxu0 0
    %152 = vmatpush1.bf16.msra.mxu0 0
    %153 = vmatprep.subr.bf16.mxu0 0
    %154 = vmatpush1.bf16.msra.mxu0 0
    %155 = vmatprep.subr.bf16.mxu0 0
    %156 = vmatpush1.bf16.msra.mxu0 0
    %157 = vmatprep.subr.bf16.mxu0 0
    %158 = vmatpush1.bf16.msra.mxu0 0
    %159 = vmatprep.subr.bf16.mxu0 0
    %160 = vmatpush1.bf16.msra.mxu0 0
    %161 = vmatprep.subr.bf16.mxu0 0
    %162 = vmatpush1.bf16.msra.mxu0 0
    %163 = vmatprep.subr.bf16.mxu0 0
    %164 = vmatpush1.bf16.msra.mxu0 0
    %165 = vmatprep.subr.bf16.mxu0 0
    %166 = vmatpush1.bf16.msra.mxu0 0
    %167 = vmatprep.mubr.bf16.mxu0 0
    %168 = vmatmul.mubr.bf16.gmra.mrb[0].mxu0 %v133
    %v169 = vpop.f32.mrb[0].mxu0
    %v170 = vadd.f32 %v114, %v169
    %v171 = vpop.f32.mrb[0].mxu0
    %v172 = vpop.f32.mrb[0].mxu0
    %v173 = vpop.f32.mrb[0].mxu0
    %174 = vdwg.mxu0
    %v175 = vld [vmem:[%s4] sm:$0x1]
    %v177 = vlaneseq
    %v178 = vshrl.u32 %v177, 7
    %v179 = vsub.s32 0, %v178
    %v180 = vrot.slane %v175, %v179
    %v182 = vadd.f32 %v170, %v180
    %v183 = vmax.f32 %v182, 0.0
    %184 = vst [vmem:[#allocation8] sm:$0xff] %v183
    // Predicated region
    $region34: #{tpu_custom_call.1} parent=1 // pred_check
      _
    $region35: #{tpu_custom_call.1} parent=1 // pred_check_branch
      %186 = sbr.rel (0) target = $region37
    $region36: #{tpu_custom_call.1} parent=1 // pred_region
      %s188 = ssub.s32 128, 128
      %189 = vsyncadd [#allocation4], %s188
      %s191 = sshll.u32 [#allocation8], 4
      %s192 = int_to_ptr.vmem [resolvable:$true] %s191
      %194 = dma.vmem_to_hbm [thread:$0]  %s192, 128, %s5, [#allocation4]
    $region37: #{tpu_custom_call.1} parent=1 // pred_fallthru
      _
    // Predicated region
    $region38: #{tpu_custom_call.1} parent=1 // pred_check
      _
    $region39: #{tpu_custom_call.1} parent=1 // pred_check_branch
      %196 = sbr.rel (0) target = $region41
    $region40: #{tpu_custom_call.1} parent=1 // pred_region
      %197 = dma.done [#allocation4], 128
    $region41: #{tpu_custom_call.1} parent=1 // pred_fallthru
      _
    %198 = vsyncpa [#allocation3], 1
    %199 = vsyncpa [#allocation6], 1
    %200 = vsyncpa [#allocation4], 1

</llo_original>
